<compile_context>
chip_gen: v7x
topology: tpu7x:2x2x1
jax: 0.10.0
libtpu: 0.0.40
codegen_flags: <defaults>
</compile_context>

<pallas_src>
import jax
import jax.numpy as jnp
from jax.experimental import pallas as pl
from jax.experimental.pallas import tpu as pltpu


def time_embedding_kernel(x_ref, w1_ref, b1_ref, w2_ref, b2_ref, o_ref):
    # ---- linear_1: (B, n_embd) @ (n_embd, 4n) -> f32, + bias f32 ----
    # Recomputed per output tile; x/w1/b1 are VMEM-resident (constant block
    # index) so this costs no extra DMA and only a few MFLOPs.
    h = jnp.dot(x_ref[...], w1_ref[...], preferred_element_type=jnp.float32)
    h = h + b1_ref[...]                        # broadcast (1, 4n) over rows
    # ---- SiLU (f32, EUP) ----
    h = h * jax.nn.sigmoid(h)
    # ---- linear_2 tile: (B, 4n) @ (4n, tn) -> f32, + bias f32 ----
    out = jnp.dot(h.astype(w2_ref.dtype), w2_ref[...],
                  preferred_element_type=jnp.float32)
    out = out + b2_ref[...]
    o_ref[...] = out.astype(o_ref.dtype)


_VMEM_BUDGET_BYTES = 14 << 20   # stay under v5e's 16 MiB default scoped limit


def _valid_num_tiles(n_hidden, t):
    # Output / w2 tile last dim must be a multiple of 128 (or the full dim).
    return n_hidden % t == 0 and (t == 1 or (n_hidden // t) % 128 == 0)


def _default_num_tiles(n_hidden):
    # 2 TensorCores on v7x want a 2-way "parallel" grid; 1-TC chips want 1.
    try:
        kind = jax.devices()[0].device_kind.lower()
    except Exception:  # pragma: no cover - defensive only
        kind = ""
    t = 2 if "v7" in kind else 1
    return t if _valid_num_tiles(n_hidden, t) else 1


def _vmem_estimate(B, n_embd, n_hidden, tn, out_itemsize, w_itemsize):
    resident = (B * n_embd + n_embd * n_hidden) * w_itemsize + n_hidden * 4
    streamed = n_hidden * tn * w_itemsize + tn * 4 + B * tn * out_itemsize
    # Worst case: pipeline double-buffers everything.
    return 2 * (resident + streamed)


def time_embedding(x, w1, b1, w2, b2, *, num_tiles=None, out_dtype=None,
                   weight_dtype=jnp.bfloat16):
    """x: (B, n_embd); w1: (n_embd, 4n); b1: (1, 4n); w2: (4n, 4n); b2: (1, 4n).

    Weight layout is (in_features, out_features), i.e. x @ W + b, equivalent
    to PyTorch's x @ W.T + b with W stored (out, in).
    """
    B, n_embd = x.shape
    n_hidden = w1.shape[1]                     # 4 * n_embd
    assert w1.shape == (n_embd, n_hidden)
    assert w2.shape == (n_hidden, n_hidden)
    assert b1.shape == (1, n_hidden) and b2.shape == (1, n_hidden)
    out_dtype = x.dtype if out_dtype is None else out_dtype

    if num_tiles is None:
        num_tiles = _default_num_tiles(n_hidden)
    assert _valid_num_tiles(n_hidden, num_tiles), (n_hidden, num_tiles)

    w_itemsize = jnp.dtype(weight_dtype).itemsize
    out_itemsize = jnp.dtype(out_dtype).itemsize
    # Reinstate w2 tiling only if VMEM pressure demands it (very wide models).
    while (_vmem_estimate(B, n_embd, n_hidden, n_hidden // num_tiles,
                          out_itemsize, w_itemsize) > _VMEM_BUDGET_BYTES
           and _valid_num_tiles(n_hidden, num_tiles * 2)):
        num_tiles *= 2
    tn = n_hidden // num_tiles

    # Narrow weight/activation streams; f32 biases and accumulation.
    xb = x.astype(weight_dtype)
    w1b = w1.astype(weight_dtype)
    w2b = w2.astype(weight_dtype)
    b1f = b1.astype(jnp.float32)
    b2f = b2.astype(jnp.float32)

    # Advisory cost hint (linear_1 + SiLU are recomputed once per tile).
    cost = pl.CostEstimate(
        flops=(num_tiles * 2 * B * n_embd * n_hidden
               + 2 * B * n_hidden * n_hidden),
        transcendentals=num_tiles * B * n_hidden,
        bytes_accessed=((xb.size + w1b.size + w2b.size) * w_itemsize
                        + (b1f.size + b2f.size) * 4
                        + B * n_hidden * out_itemsize),
    )

    def build(single_buffer_resident):
        resident_mode = {}
        if single_buffer_resident and num_tiles > 1:
            # Block index never changes across the grid -> one buffer suffices.
            resident_mode = dict(pipeline_mode=pl.Buffered(1))
        return pl.pallas_call(
            time_embedding_kernel,
            out_shape=jax.ShapeDtypeStruct((B, n_hidden), out_dtype),
            grid_spec=pltpu.PrefetchScalarGridSpec(
                num_scalar_prefetch=0,
                grid=(num_tiles,),
                in_specs=[
                    # Resident across the tile axis (constant block index):
                    pl.BlockSpec((B, n_embd), lambda j: (0, 0),
                                 **resident_mode),                       # x
                    pl.BlockSpec((n_embd, n_hidden), lambda j: (0, 0),
                                 **resident_mode),                       # w1
                    pl.BlockSpec((1, n_hidden), lambda j: (0, 0),
                                 **resident_mode),                       # b1
                    # Streamed per output tile:
                    pl.BlockSpec((n_hidden, tn), lambda j: (0, j)),      # w2
                    pl.BlockSpec((1, tn), lambda j: (0, j)),             # b2
                ],
                out_specs=pl.BlockSpec((B, tn), lambda j: (0, j)),
            ),
            compiler_params=pltpu.CompilerParams(
                dimension_semantics=("parallel",)),
            cost_estimate=cost,
        )

    try:
        return build(True)(xb, w1b, b1f, w2b, b2f)
    except Exception:
        # pipeline_mode=Buffered(1) is a pure VMEM optimization; fall back
        # gracefully if the installed jax/Mosaic rejects it.
        return build(False)(xb, w1b, b1f, w2b, b2f)


def init_params(key, n_embd, dtype=jnp.float32):
    """Deterministic init matching PyTorch Linear shapes (stored transposed)."""
    n_hidden = 4 * n_embd
    k1, k2, k3, k4 = jax.random.split(key, 4)
    bound1 = 1.0 / float(jnp.sqrt(n_embd))
    bound2 = 1.0 / float(jnp.sqrt(n_hidden))
    w1 = jax.random.uniform(k1, (n_embd, n_hidden), dtype, -bound1, bound1)
    b1 = jax.random.uniform(k2, (1, n_hidden), dtype, -bound1, bound1)
    w2 = jax.random.uniform(k3, (n_hidden, n_hidden), dtype, -bound2, bound2)
    b2 = jax.random.uniform(k4, (1, n_hidden), dtype, -bound2, bound2)
    return w1, b1, w2, b2


def time_embedding_ref(x, w1, b1, w2, b2, weight_dtype=jnp.bfloat16):
    """Pure-JAX reference mirroring the kernel's narrow-input / f32-accum numerics."""
    f32 = jnp.float32
    xb = x.astype(weight_dtype).astype(f32)
    w1b = w1.astype(weight_dtype).astype(f32)
    w2b = w2.astype(weight_dtype).astype(f32)
    h = xb @ w1b + b1.astype(f32)
    h = h * jax.nn.sigmoid(h)
    hb = h.astype(weight_dtype).astype(f32)
    out = hb @ w2b + b2.astype(f32)
    return out.astype(x.dtype)


if __name__ == "__main__":
    key = jax.random.PRNGKey(0)

    def run_case(case_key, n_embd, batch, num_tiles):
        kx, kp = jax.random.split(case_key)
        x = jax.random.normal(kx, (batch, n_embd), dtype=jnp.float32)
        w1, b1, w2, b2 = init_params(kp, n_embd)
        out = time_embedding(x, w1, b1, w2, b2, num_tiles=num_tiles)
        out = jax.block_until_ready(out)
        ref = time_embedding_ref(x, w1, b1, w2, b2)
        assert out.shape == (batch, 4 * n_embd)
        err = float(jnp.max(jnp.abs(out - ref)))
        assert jnp.allclose(out, ref, atol=2e-3, rtol=2e-3), (
            n_embd, batch, num_tiles, err)

    k1, k2, k3 = jax.random.split(key, 3)
    # Small config, auto tile count (grid=(1,) on 1-TC chips, 2 on v7x).
    run_case(k1, n_embd=64, batch=8, num_tiles=None)
    # Explicit 2-tile path: exercises the pipelined "parallel" grid + Buffered(1).
    run_case(k2, n_embd=64, batch=8, num_tiles=2)
    # SD-shaped config (n_embd=320, batch=1): exercises (1, tn) output stores.
    run_case(k3, n_embd=320, batch=1, num_tiles=None)

    print("KERNEL_OK")
</pallas_src>

<mosaic_0001>
module attributes {stable_mosaic.version = 11 : i64} {
  func.func @time_embedding_kernel(%arg0: i32, %arg1: memref<8x64xbf16, #tpu.memory_space<vmem>>, %arg2: memref<64x256xbf16, #tpu.memory_space<vmem>>, %arg3: memref<1x256xf32, #tpu.memory_space<vmem>>, %arg4: memref<256x256xbf16, #tpu.memory_space<vmem>>, %arg5: memref<1x256xf32, #tpu.memory_space<vmem>>, %arg6: memref<8x256xf32, #tpu.memory_space<vmem>>) attributes {dimension_semantics = [#tpu.dimension_semantics<parallel>], iteration_bounds = array<i64: 1>, scalar_prefetch = 0 : i64, scratch_operands = 0 : i64, tpu.core_type = #tpu.core_type<tc>, window_params = [{pipeline_mode = #tpu.pipeline_mode<synchronous>, transform_indices = @transform_0, window_bounds = array<i64: 8, 64>}, {pipeline_mode = #tpu.pipeline_mode<synchronous>, transform_indices = @transform_1, window_bounds = array<i64: 64, 256>}, {pipeline_mode = #tpu.pipeline_mode<synchronous>, transform_indices = @transform_2, window_bounds = array<i64: 1, 256>}, {transform_indices = @transform_3, window_bounds = array<i64: 256, 256>}, {transform_indices = @transform_4, window_bounds = array<i64: 1, 256>}, {transform_indices = @transform_5, window_bounds = array<i64: 8, 256>}]} {
    %c0 = arith.constant 0 : index
    %c0_0 = arith.constant 0 : index
    %0 = vector.load %arg1[%c0, %c0_0] : memref<8x64xbf16, #tpu.memory_space<vmem>>, vector<8x64xbf16>
    %c0_1 = arith.constant 0 : index
    %c0_2 = arith.constant 0 : index
    %1 = vector.load %arg2[%c0_1, %c0_2] : memref<64x256xbf16, #tpu.memory_space<vmem>>, vector<64x256xbf16>
    %cst = arith.constant dense<0.000000e+00> : vector<8x256xf32>
    %2 = tpu.matmul %0, %1, %cst {dimension_numbers = #tpu.dot_dimension_numbers<[1], [0], [0], [1], [0, 0, 1, 1], [], []>} : vector<8x64xbf16>, vector<64x256xbf16>, vector<8x256xf32> -> vector<8x256xf32>
    %c0_3 = arith.constant 0 : index
    %c0_4 = arith.constant 0 : index
    %3 = vector.load %arg3[%c0_3, %c0_4] : memref<1x256xf32, #tpu.memory_space<vmem>>, vector<1x256xf32>
    %4 = vector.broadcast %3 : vector<1x256xf32> to vector<8x256xf32>
    %5 = arith.addf %2, %4 : vector<8x256xf32>
    %6 = arith.negf %5 : vector<8x256xf32>
    %7 = math.exp %6 : vector<8x256xf32>
    %cst_5 = arith.constant 1.000000e+00 : f32
    %8 = vector.broadcast %cst_5 : f32 to vector<8x256xf32>
    %9 = arith.addf %8, %7 : vector<8x256xf32>
    %10 = arith.divf %8, %9 : vector<8x256xf32>
    %11 = arith.mulf %5, %10 : vector<8x256xf32>
    %12 = arith.truncf %11 : vector<8x256xf32> to vector<8x256xbf16>
    %c0_6 = arith.constant 0 : index
    %c0_7 = arith.constant 0 : index
    %13 = vector.load %arg4[%c0_6, %c0_7] : memref<256x256xbf16, #tpu.memory_space<vmem>>, vector<256x256xbf16>
    %cst_8 = arith.constant dense<0.000000e+00> : vector<8x256xf32>
    %14 = tpu.matmul %12, %13, %cst_8 {dimension_numbers = #tpu.dot_dimension_numbers<[1], [0], [0], [1], [0, 0, 1, 1], [], []>} : vector<8x256xbf16>, vector<256x256xbf16>, vector<8x256xf32> -> vector<8x256xf32>
    %c0_9 = arith.constant 0 : index
    %c0_10 = arith.constant 0 : index
    %15 = vector.load %arg5[%c0_9, %c0_10] : memref<1x256xf32, #tpu.memory_space<vmem>>, vector<1x256xf32>
    %16 = vector.broadcast %15 : vector<1x256xf32> to vector<8x256xf32>
    %17 = arith.addf %14, %16 : vector<8x256xf32>
    %c0_11 = arith.constant 0 : index
    %c0_12 = arith.constant 0 : index
    %18 = vector.load %arg6[%c0_11, %c0_12] : memref<8x256xf32, #tpu.memory_space<vmem>>, vector<8x256xf32>
    tpu.vector_store %arg6[%c0_11, %c0_12], %17 {strides = array<i32>} : memref<8x256xf32, #tpu.memory_space<vmem>>, vector<8x256xf32>,
    return
  }
  func.func @transform_0(%arg0: i32) -> (i32, i32) {
    %c0_i32 = arith.constant 0 : i32
    %c0_i32_0 = arith.constant 0 : i32
    %c0_i32_1 = arith.constant 0 : i32
    return %c0_i32, %c0_i32_0 : i32, i32
  }
  func.func @transform_1(%arg0: i32) -> (i32, i32) {
    %c0_i32 = arith.constant 0 : i32
    %c0_i32_0 = arith.constant 0 : i32
    %c0_i32_1 = arith.constant 0 : i32
    return %c0_i32, %c0_i32_0 : i32, i32
  }
  func.func @transform_2(%arg0: i32) -> (i32, i32) {
    %c0_i32 = arith.constant 0 : i32
    %c0_i32_0 = arith.constant 0 : i32
    %c0_i32_1 = arith.constant 0 : i32
    return %c0_i32, %c0_i32_0 : i32, i32
  }
  func.func @transform_3(%arg0: i32) -> (i32, i32) {
    %c0_i32 = arith.constant 0 : i32
    %c0_i32_0 = arith.constant 0 : i32
    return %c0_i32, %arg0 : i32, i32
  }
  func.func @transform_4(%arg0: i32) -> (i32, i32) {
    %c0_i32 = arith.constant 0 : i32
    %c0_i32_0 = arith.constant 0 : i32
    return %c0_i32, %arg0 : i32, i32
  }
  func.func @transform_5(%arg0: i32) -> (i32, i32) {
    %c0_i32 = arith.constant 0 : i32
    %c0_i32_0 = arith.constant 0 : i32
    return %c0_i32, %arg0 : i32, i32
  }
}

module attributes {stable_mosaic.version = 11 : i64} {
  func.func @time_embedding_kernel(%arg0: i32, %arg1: memref<8x64xbf16, #tpu.memory_space<vmem>>, %arg2: memref<64x256xbf16, #tpu.memory_space<vmem>>, %arg3: memref<1x256xf32, #tpu.memory_space<vmem>>, %arg4: memref<256x256xbf16, #tpu.memory_space<vmem>>, %arg5: memref<1x256xf32, #tpu.memory_space<vmem>>, %arg6: memref<8x256xf32, #tpu.memory_space<vmem>>) attributes {dimension_semantics = [#tpu.dimension_semantics<parallel>], iteration_bounds = array<i64: 1>, scalar_prefetch = 0 : i64, scratch_operands = 0 : i64, tpu.core_type = #tpu.core_type<tc>, window_params = [{pipeline_mode = #tpu.pipeline_mode<synchronous>, transform_indices = @transform_0, window_bounds = array<i64: 8, 64>}, {pipeline_mode = #tpu.pipeline_mode<synchronous>, transform_indices = @transform_1, window_bounds = array<i64: 64, 256>}, {pipeline_mode = #tpu.pipeline_mode<synchronous>, transform_indices = @transform_2, window_bounds = array<i64: 1, 256>}, {transform_indices = @transform_3, window_bounds = array<i64: 256, 256>}, {transform_indices = @transform_4, window_bounds = array<i64: 1, 256>}, {transform_indices = @transform_5, window_bounds = array<i64: 8, 256>}]} {
    %c0 = arith.constant 0 : index
    %c0_0 = arith.constant 0 : index
    %0 = vector.load %arg1[%c0, %c0_0] : memref<8x64xbf16, #tpu.memory_space<vmem>>, vector<8x64xbf16>
    %c0_1 = arith.constant 0 : index
    %c0_2 = arith.constant 0 : index
    %1 = vector.load %arg2[%c0_1, %c0_2] : memref<64x256xbf16, #tpu.memory_space<vmem>>, vector<64x256xbf16>
    %cst = arith.constant dense<0.000000e+00> : vector<8x256xf32>
    %2 = tpu.matmul %0, %1, %cst {dimension_numbers = #tpu.dot_dimension_numbers<[1], [0], [0], [1], [0, 0, 1, 1], [], []>} : vector<8x64xbf16>, vector<64x256xbf16>, vector<8x256xf32> -> vector<8x256xf32>
    %c0_3 = arith.constant 0 : index
    %c0_4 = arith.constant 0 : index
    %3 = vector.load %arg3[%c0_3, %c0_4] : memref<1x256xf32, #tpu.memory_space<vmem>>, vector<1x256xf32>
    %4 = vector.broadcast %3 : vector<1x256xf32> to vector<8x256xf32>
    %5 = arith.addf %2, %4 : vector<8x256xf32>
    %6 = arith.negf %5 : vector<8x256xf32>
    %7 = math.exp %6 : vector<8x256xf32>
    %cst_5 = arith.constant 1.000000e+00 : f32
    %8 = vector.broadcast %cst_5 : f32 to vector<8x256xf32>
    %9 = arith.addf %8, %7 : vector<8x256xf32>
    %10 = arith.divf %8, %9 : vector<8x256xf32>
    %11 = arith.mulf %5, %10 : vector<8x256xf32>
    %12 = arith.truncf %11 : vector<8x256xf32> to vector<8x256xbf16>
    %c0_6 = arith.constant 0 : index
    %c0_7 = arith.constant 0 : index
    %13 = vector.load %arg4[%c0_6, %c0_7] : memref<256x256xbf16, #tpu.memory_space<vmem>>, vector<256x256xbf16>
    %cst_8 = arith.constant dense<0.000000e+00> : vector<8x256xf32>
    %14 = tpu.matmul %12, %13, %cst_8 {dimension_numbers = #tpu.dot_dimension_numbers<[1], [0], [0], [1], [0, 0, 1, 1], [], []>} : vector<8x256xbf16>, vector<256x256xbf16>, vector<8x256xf32> -> vector<8x256xf32>
    %c0_9 = arith.constant 0 : index
    %c0_10 = arith.constant 0 : index
    %15 = vector.load %arg5[%c0_9, %c0_10] : memref<1x256xf32, #tpu.memory_space<vmem>>, vector<1x256xf32>
    %16 = vector.broadcast %15 : vector<1x256xf32> to vector<8x256xf32>
    %17 = arith.addf %14, %16 : vector<8x256xf32>
    %c0_11 = arith.constant 0 : index
    %c0_12 = arith.constant 0 : index
    %18 = vector.load %arg6[%c0_11, %c0_12] : memref<8x256xf32, #tpu.memory_space<vmem>>, vector<8x256xf32>
    tpu.vector_store %arg6[%c0_11, %c0_12], %17 {strides = array<i32>} : memref<8x256xf32, #tpu.memory_space<vmem>>, vector<8x256xf32>,
    return
  }
  func.func @transform_0(%arg0: i32) -> (i32, i32) {
    %c0_i32 = arith.constant 0 : i32
    %c0_i32_0 = arith.constant 0 : i32
    %c0_i32_1 = arith.constant 0 : i32
    return %c0_i32, %c0_i32_0 : i32, i32
  }
  func.func @transform_1(%arg0: i32) -> (i32, i32) {
    %c0_i32 = arith.constant 0 : i32
    %c0_i32_0 = arith.constant 0 : i32
    %c0_i32_1 = arith.constant 0 : i32
    return %c0_i32, %c0_i32_0 : i32, i32
  }
  func.func @transform_2(%arg0: i32) -> (i32, i32) {
    %c0_i32 = arith.constant 0 : i32
    %c0_i32_0 = arith.constant 0 : i32
    %c0_i32_1 = arith.constant 0 : i32
    return %c0_i32, %c0_i32_0 : i32, i32
  }
  func.func @transform_3(%arg0: i32) -> (i32, i32) {
    %c0_i32 = arith.constant 0 : i32
    %c0_i32_0 = arith.constant 0 : i32
    return %c0_i32, %arg0 : i32, i32
  }
  func.func @transform_4(%arg0: i32) -> (i32, i32) {
    %c0_i32 = arith.constant 0 : i32
    %c0_i32_0 = arith.constant 0 : i32
    return %c0_i32, %arg0 : i32, i32
  }
  func.func @transform_5(%arg0: i32) -> (i32, i32) {
    %c0_i32 = arith.constant 0 : i32
    %c0_i32_0 = arith.constant 0 : i32
    return %c0_i32, %arg0 : i32, i32
  }
}

</mosaic_0001>

<llo_original>
// kernel: tpu_custom_call.1
$region0: #{tpu_custom_call.1}
  #allocation0 [shape = 'u32[]', space=smem, size = 0x4, offset = 0x4, fixed_abs, tag = 'smem constant byte address 0x4 - core index']
  #allocation1 [shape = 'u32[144,128]{1,0:T(1,128)}', space=vmem, size = 0x12000, scoped, tag = 'internal scratch']
  %s0 = inlined_call_operand.hbm [shape: bf16[8,64], index: 0, kind: input, shape index: {}]
  %s1 = inlined_call_operand.hbm [shape: bf16[64,256], index: 1, kind: input, shape index: {}]
  %s2 = inlined_call_operand.vmem [shape: f32[1,256], index: 2, kind: input, shape index: {}]
  %s3 = inlined_call_operand.hbm [shape: bf16[256,256], index: 3, kind: input, shape index: {}]
  %s4 = inlined_call_operand.vmem [shape: f32[1,256], index: 4, kind: input, shape index: {}]
  %s5 = inlined_call_operand.hbm [shape: f32[8,256], index: 5, kind: output, shape index: {}]
  %s6 = sld [smem:[#allocation0]]
  $region42: #{tpu_custom_call.1} parent=0
    _
  %s8 = ssub.s32 1, %s6
  %s9 = scalar_select 0, %s8, %s6
  $region1: #{tpu_custom_call.1} parent=0
    #allocation2 [shape = 'u8[2048]{0}', space=vmem, size = 0x800, scoped, tag = 'input window, operand 0, single buffered']
    #allocation3 [shape = 's32[1]{0}', space=sflag, size = 0x4, scoped, tag = 'scoped memory for tpu_custom_call.1']
    #allocation4 [shape = 's32[1]{0}', space=sflag, size = 0x4, scoped, tag = 'scoped memory for tpu_custom_call.1']
    #allocation5 [shape = 'u8[32768]{0}', space=vmem, size = 0x8000, scoped, tag = 'input window, operand 1, single buffered']
    #allocation6 [shape = 's32[1]{0}', space=sflag, size = 0x4, scoped, tag = 'scoped memory for tpu_custom_call.1']
    #allocation7 [shape = 'u8[131072]{0}', space=vmem, size = 0x20000, scoped, tag = 'input window, operand 3, single buffered']
    #allocation8 [shape = 'u8[8192]{0}', space=vmem, size = 0x2000, scoped, tag = 'output window, operand 0, single buffered']
    %10 = vsyncpa [#allocation3], 0
    %11 = vsyncpa [#allocation6], 0
    %12 = vsyncpa [#allocation4], 0
    // Predicated region
    $region2: #{tpu_custom_call.1} parent=1 // pred_check
      _
    $region3: #{tpu_custom_call.1} parent=1 // pred_check_branch
      %14 = sbr.rel (0) target = $region5
    $region4: #{tpu_custom_call.1} parent=1 // pred_region
      %s16 = ssub.s32 64, 64
      %17 = vsyncadd [#allocation3], %s16
      %s19 = sshll.u32 [#allocation2], 4
      %s20 = int_to_ptr.vmem [resolvable:$true] %s19
      %22 = dma.hbm_to_vmem [thread:$0]  %s0, 64, %s20, [#allocation3]
    $region5: #{tpu_custom_call.1} parent=1 // pred_fallthru
      _
    // Predicated region
    $region6: #{tpu_custom_call.1} parent=1 // pred_check
      _
    $region7: #{tpu_custom_call.1} parent=1 // pred_check_branch
      %24 = sbr.rel (0) target = $region9
    $region8: #{tpu_custom_call.1} parent=1 // pred_region
      %s26 = ssub.s32 1024, 1024
      %27 = vsyncadd [#allocation6], %s26
      %s28 = sshll.u32 [#allocation5], 4
      %s29 = int_to_ptr.vmem [resolvable:$true] %s28
      %34 = dma.hbm_to_vmem [thread:$0]  %s1, 1024, %s29, [#allocation6], 128, 128, 8
    $region9: #{tpu_custom_call.1} parent=1 // pred_fallthru
      _
    // Predicated region
    $region10: #{tpu_custom_call.1} parent=1 // pred_check
      _
    $region11: #{tpu_custom_call.1} parent=1 // pred_check_branch
      %36 = sbr.rel (0) target = $region13
    $region12: #{tpu_custom_call.1} parent=1 // pred_region
      _
    $region13: #{tpu_custom_call.1} parent=1 // pred_fallthru
      _
    // Predicated region
    $region14: #{tpu_custom_call.1} parent=1 // pred_check
      _
    $region15: #{tpu_custom_call.1} parent=1 // pred_check_branch
      %38 = sbr.rel (0) target = $region17
    $region16: #{tpu_custom_call.1} parent=1 // pred_region
      %s40 = ssub.s32 4096, 4096
      %41 = vsyncadd [#allocation6], %s40
      %s42 = sshll.u32 [#allocation7], 4
      %s43 = int_to_ptr.vmem [resolvable:$true] %s42
      %48 = dma.hbm_to_vmem [thread:$0]  %s3, 4096, %s43, [#allocation6], 128, 128, 8
    $region17: #{tpu_custom_call.1} parent=1 // pred_fallthru
      _
    // Predicated region
    $region18: #{tpu_custom_call.1} parent=1 // pred_check
      _
    $region19: #{tpu_custom_call.1} parent=1 // pred_check_branch
      %50 = sbr.rel (0) target = $region21
    $region20: #{tpu_custom_call.1} parent=1 // pred_region
      _
    $region21: #{tpu_custom_call.1} parent=1 // pred_fallthru
      _
    // Predicated region
    $region22: #{tpu_custom_call.1} parent=1 // pred_check
      _
    $region23: #{tpu_custom_call.1} parent=1 // pred_check_branch
      %52 = sbr.rel (0) target = $region25
    $region24: #{tpu_custom_call.1} parent=1 // pred_region
      %53 = dma.done [#allocation3], 64
    $region25: #{tpu_custom_call.1} parent=1 // pred_fallthru
      _
    // Predicated region
    $region26: #{tpu_custom_call.1} parent=1 // pred_check
      _
    $region27: #{tpu_custom_call.1} parent=1 // pred_check_branch
      %55 = sbr.rel (0) target = $region29
    $region28: #{tpu_custom_call.1} parent=1 // pred_region
      %56 = dma.done [#allocation6], 1024
    $region29: #{tpu_custom_call.1} parent=1 // pred_fallthru
      _
    // Predicated region
    $region30: #{tpu_custom_call.1} parent=1 // pred_check
      _
    $region31: #{tpu_custom_call.1} parent=1 // pred_check_branch
      %58 = sbr.rel (0) target = $region33
    $region32: #{tpu_custom_call.1} parent=1 // pred_region
      %59 = dma.done [#allocation6], 4096
    $region33: #{tpu_custom_call.1} parent=1 // pred_fallthru
      _
    %v61 = vld [vmem:[#allocation2] sm:$0xf]
    %v62 = vld [vmem:[#allocation5] sm:$0xff]
    %v63 = vld [vmem:[#allocation5 + $0x8] sm:$0xff]
    %v64 = vld [vmem:[#allocation5 + $0x10] sm:$0xff]
    %v65 = vld [vmem:[#allocation5 + $0x18] sm:$0xff]
    %v66 = vld [vmem:[#allocation5 + $0x20] sm:$0xff]
    %v67 = vld [vmem:[#allocation5 + $0x28] sm:$0xff]
    %v68 = vld [vmem:[#allocation5 + $0x30] sm:$0xff]
    %v69 = vld [vmem:[#allocation5 + $0x38] sm:$0xff]
    %v70 = vld [vmem:[%s2] sm:$0x3]
    %v72 = vlaneseq
    %v73 = vshrl.u32 %v72, 7
    %v74 = vsub.s32 0, %v73
    %v75 = vrot.slane %v70, %v74
    %v76 = vlaneseq
    %v77 = vshrl.u32 %v76, 7
    %v78 = vsub.s32 1, %v77
    %v79 = vrot.slane %v70, %v78
    %v90 = vunpack.c.l.b16 %v62
    %v91 = vunpack.c.h.b16 %v62
    %v92 = vunpack.c.l.b16 %v63
    %v93 = vunpack.c.h.b16 %v63
    %v94 = vunpack.c.l.b16 %v64
    %v95 = vunpack.c.h.b16 %v64
    %v96 = vunpack.c.l.b16 %v65
    %v97 = vunpack.c.h.b16 %v65
    %v98 = vunpack.c.l.b16 %v66
    %v99 = vunpack.c.h.b16 %v66
    %v100 = vunpack.c.l.b16 %v67
    %v101 = vunpack.c.h.b16 %v67
    %v102 = vunpack.c.l.b16 %v68
    %v103 = vunpack.c.h.b16 %v68
    %v104 = vunpack.c.l.b16 %v69
    %v105 = vunpack.c.h.b16 %v69
    %v106 = vpack.c.b16 %v92, %v90
    %v107 = vpack.c.b16 %v93, %v91
    %v108 = vpack.c.b16 %v96, %v94
    %v109 = vpack.c.b16 %v97, %v95
    %v110 = vpack.c.b16 %v100, %v98
    %v111 = vpack.c.b16 %v101, %v99
    %v112 = vpack.c.b16 %v104, %v102
    %v113 = vpack.c.b16 %v105, %v103
    %vm122 = vcmask 523264
    %v124 = vsel %vm122, %v61, 0
    %126 = vmatprep.subr.bf16.mxu0 %v107
    %127 = vmatpush1.bf16.msra.mxu0 %v106
    %128 = vmatprep.subr.bf16.mxu0 %v109
    %129 = vmatpush1.bf16.msra.mxu0 %v108
    %130 = vmatprep.subr.bf16.mxu0 %v111
    %131 = vmatpush1.bf16.msra.mxu0 %v110
    %132 = vmatprep.subr.bf16.mxu0 %v113
    %133 = vmatpush1.bf16.msra.mxu0 %v112
    %134 = vmatprep.subr.bf16.mxu0 0
    %135 = vmatpush1.bf16.msra.mxu0 0
    %136 = vmatprep.subr.bf16.mxu0 0
    %137 = vmatpush1.bf16.msra.mxu0 0
    %138 = vmatprep.subr.bf16.mxu0 0
    %139 = vmatpush1.bf16.msra.mxu0 0
    %140 = vmatprep.subr.bf16.mxu0 0
    %141 = vmatpush1.bf16.msra.mxu0 0
    %142 = vmatprep.subr.bf16.mxu0 0
    %143 = vmatpush1.bf16.msra.mxu0 0
    %144 = vmatprep.subr.bf16.mxu0 0
    %145 = vmatpush1.bf16.msra.mxu0 0
    %146 = vmatprep.subr.bf16.mxu0 0
    %147 = vmatpush1.bf16.msra.mxu0 0
    %148 = vmatprep.subr.bf16.mxu0 0
    %149 = vmatpush1.bf16.msra.mxu0 0
    %150 = vmatprep.subr.bf16.mxu0 0
    %151 = vmatpush1.bf16.msra.mxu0 0
    %152 = vmatprep.subr.bf16.mxu0 0
    %153 = vmatpush1.bf16.msra.mxu0 0
    %154 = vmatprep.subr.bf16.mxu0 0
    %155 = vmatpush1.bf16.msra.mxu0 0
    %156 = vmatprep.subr.bf16.mxu0 0
    %157 = vmatpush1.bf16.msra.mxu0 0
    %158 = vmatprep.mubr.bf16.mxu0 0
    %159 = vmatmul.mubr.bf16.gmra.mrb[0].mxu0 %v124
    %v160 = vpop.f32.mrb[0].mxu0
    %v161 = vadd.f32 %v75, %v160
    %v162 = vpop.f32.mrb[0].mxu0
    %v163 = vadd.f32 %v79, %v162
    %v164 = vpop.f32.mrb[0].mxu0
    %v165 = vpop.f32.mrb[0].mxu0
    %166 = vdwg.mxu0
    %v167 = vxor.u32 %v161, 2147483648
    %v168 = vxor.u32 %v163, 2147483648
    %v169 = vmul.f32 %v167, 1.442695
    %v170 = vpow.pop %v169
    %v171 = vmul.f32 %v168, 1.442695
    %v172 = vpow.pop %v171
    %v173 = vadd.f32 %v170, 1.0
    %v174 = vadd.f32 %v172, 1.0
    %v175 = vrcp.pop %v173
    %v176 = vmul.f32 1.0, %v175
    %v177 = vrcp.pop %v174
    %v178 = vmul.f32 1.0, %v177
    %v179 = vmul.f32 %v161, %v176
    %v180 = vmul.f32 %v163, %v178
    %v181 = vpack.c.bf16 %v179, %v179
    %v182 = vpack.c.bf16 %v180, %v180
    %v183 = vld [vmem:[#allocation7] sm:$0xff]
    %v184 = vld [vmem:[#allocation7 + $0x8] sm:$0xff]
    %v185 = vld [vmem:[#allocation7 + $0x10] sm:$0xff]
    %v186 = vld [vmem:[#allocation7 + $0x18] sm:$0xff]
    %v187 = vld [vmem:[#allocation7 + $0x20] sm:$0xff]
    %v188 = vld [vmem:[#allocation7 + $0x28] sm:$0xff]
    %v189 = vld [vmem:[#allocation7 + $0x30] sm:$0xff]
    %v190 = vld [vmem:[#allocation7 + $0x38] sm:$0xff]
    %v191 = vld [vmem:[#allocation7 + $0x40] sm:$0xff]
    %v192 = vld [vmem:[#allocation7 + $0x48] sm:$0xff]
    %v193 = vld [vmem:[#allocation7 + $0x50] sm:$0xff]
    %v194 = vld [vmem:[#allocation7 + $0x58] sm:$0xff]
    %v195 = vld [vmem:[#allocation7 + $0x60] sm:$0xff]
    %v196 = vld [vmem:[#allocation7 + $0x68] sm:$0xff]
    %v197 = vld [vmem:[#allocation7 + $0x70] sm:$0xff]
    %v198 = vld [vmem:[#allocation7 + $0x78] sm:$0xff]
    %v199 = vld [vmem:[#allocation7 + $0x80] sm:$0xff]
    %v200 = vld [vmem:[#allocation7 + $0x88] sm:$0xff]
    %v201 = vld [vmem:[#allocation7 + $0x90] sm:$0xff]
    %v202 = vld [vmem:[#allocation7 + $0x98] sm:$0xff]
    %v203 = vld [vmem:[#allocation7 + $0xa0] sm:$0xff]
    %v204 = vld [vmem:[#allocation7 + $0xa8] sm:$0xff]
    %v205 = vld [vmem:[#allocation7 + $0xb0] sm:$0xff]
    %v206 = vld [vmem:[#allocation7 + $0xb8] sm:$0xff]
    %v207 = vld [vmem:[#allocation7 + $0xc0] sm:$0xff]
    %v208 = vld [vmem:[#allocation7 + $0xc8] sm:$0xff]
    %v209 = vld [vmem:[#allocation7 + $0xd0] sm:$0xff]
    %v210 = vld [vmem:[#allocation7 + $0xd8] sm:$0xff]
    %v211 = vld [vmem:[#allocation7 + $0xe0] sm:$0xff]
    %v212 = vld [vmem:[#allocation7 + $0xe8] sm:$0xff]
    %v213 = vld [vmem:[#allocation7 + $0xf0] sm:$0xff]
    %v214 = vld [vmem:[#allocation7 + $0xf8] sm:$0xff]
    %v215 = vld [vmem:[%s4] sm:$0x3]
    %v217 = vlaneseq
    %v218 = vshrl.u32 %v217, 7
    %v219 = vsub.s32 0, %v218
    %v220 = vrot.slane %v215, %v219
    %v221 = vlaneseq
    %v222 = vshrl.u32 %v221, 7
    %v223 = vsub.s32 1, %v222
    %v224 = vrot.slane %v215, %v223
    %v259 = vunpack.c.l.b16 %v183
    %v260 = vunpack.c.h.b16 %v183
    %v261 = vunpack.c.l.b16 %v184
    %v262 = vunpack.c.h.b16 %v184
    %v263 = vunpack.c.l.b16 %v185
    %v264 = vunpack.c.h.b16 %v185
    %v265 = vunpack.c.l.b16 %v186
    %v266 = vunpack.c.h.b16 %v186
    %v267 = vunpack.c.l.b16 %v187
    %v268 = vunpack.c.h.b16 %v187
    %v269 = vunpack.c.l.b16 %v188
    %v270 = vunpack.c.h.b16 %v188
    %v271 = vunpack.c.l.b16 %v189
    %v272 = vunpack.c.h.b16 %v189
    %v273 = vunpack.c.l.b16 %v190
    %v274 = vunpack.c.h.b16 %v190
    %v275 = vunpack.c.l.b16 %v191
    %v276 = vunpack.c.h.b16 %v191
    %v277 = vunpack.c.l.b16 %v192
    %v278 = vunpack.c.h.b16 %v192
    %v279 = vunpack.c.l.b16 %v193
    %v280 = vunpack.c.h.b16 %v193
    %v281 = vunpack.c.l.b16 %v194
    %v282 = vunpack.c.h.b16 %v194
    %v283 = vunpack.c.l.b16 %v195
    %v284 = vunpack.c.h.b16 %v195
    %v285 = vunpack.c.l.b16 %v196
    %v286 = vunpack.c.h.b16 %v196
    %v287 = vunpack.c.l.b16 %v197
    %v288 = vunpack.c.h.b16 %v197
    %v289 = vunpack.c.l.b16 %v198
    %v290 = vunpack.c.h.b16 %v198
    %v291 = vunpack.c.l.b16 %v199
    %v292 = vunpack.c.h.b16 %v199
    %v293 = vunpack.c.l.b16 %v200
    %v294 = vunpack.c.h.b16 %v200
    %v295 = vunpack.c.l.b16 %v201
    %v296 = vunpack.c.h.b16 %v201
    %v297 = vunpack.c.l.b16 %v202
    %v298 = vunpack.c.h.b16 %v202
    %v299 = vunpack.c.l.b16 %v203
    %v300 = vunpack.c.h.b16 %v203
    %v301 = vunpack.c.l.b16 %v204
    %v302 = vunpack.c.h.b16 %v204
    %v303 = vunpack.c.l.b16 %v205
    %v304 = vunpack.c.h.b16 %v205
    %v305 = vunpack.c.l.b16 %v206
    %v306 = vunpack.c.h.b16 %v206
    %v307 = vunpack.c.l.b16 %v207
    %v308 = vunpack.c.h.b16 %v207
    %v309 = vunpack.c.l.b16 %v208
    %v310 = vunpack.c.h.b16 %v208
    %v311 = vunpack.c.l.b16 %v209
    %v312 = vunpack.c.h.b16 %v209
    %v313 = vunpack.c.l.b16 %v210
    %v314 = vunpack.c.h.b16 %v210
    %v315 = vunpack.c.l.b16 %v211
    %v316 = vunpack.c.h.b16 %v211
    %v317 = vunpack.c.l.b16 %v212
    %v318 = vunpack.c.h.b16 %v212
    %v319 = vunpack.c.l.b16 %v213
    %v320 = vunpack.c.h.b16 %v213
    %v321 = vunpack.c.l.b16 %v214
    %v322 = vunpack.c.h.b16 %v214
    %v323 = vpack.c.b16 %v261, %v259
    %v324 = vpack.c.b16 %v262, %v260
    %v325 = vpack.c.b16 %v265, %v263
    %v326 = vpack.c.b16 %v266, %v264
    %v327 = vpack.c.b16 %v269, %v267
    %v328 = vpack.c.b16 %v270, %v268
    %v329 = vpack.c.b16 %v273, %v271
    %v330 = vpack.c.b16 %v274, %v272
    %v331 = vpack.c.b16 %v277, %v275
    %v332 = vpack.c.b16 %v278, %v276
    %v333 = vpack.c.b16 %v281, %v279
    %v334 = vpack.c.b16 %v282, %v280
    %v335 = vpack.c.b16 %v285, %v283
    %v336 = vpack.c.b16 %v286, %v284
    %v337 = vpack.c.b16 %v289, %v287
    %v338 = vpack.c.b16 %v290, %v288
    %v339 = vpack.c.b16 %v293, %v291
    %v340 = vpack.c.b16 %v294, %v292
    %v341 = vpack.c.b16 %v297, %v295
    %v342 = vpack.c.b16 %v298, %v296
    %v343 = vpack.c.b16 %v301, %v299
    %v344 = vpack.c.b16 %v302, %v300
    %v345 = vpack.c.b16 %v305, %v303
    %v346 = vpack.c.b16 %v306, %v304
    %v347 = vpack.c.b16 %v309, %v307
    %v348 = vpack.c.b16 %v310, %v308
    %v349 = vpack.c.b16 %v313, %v311
    %v350 = vpack.c.b16 %v314, %v312
    %v351 = vpack.c.b16 %v317, %v315
    %v352 = vpack.c.b16 %v318, %v316
    %v353 = vpack.c.b16 %v321, %v319
    %v354 = vpack.c.b16 %v322, %v320
    %387 = vmatprep.subr.bf16.mxu0 %v324
    %388 = vmatpush1.bf16.msra.mxu0 %v323
    %389 = vmatprep.subr.bf16.mxu0 %v326
    %390 = vmatpush1.bf16.msra.mxu0 %v325
    %391 = vmatprep.subr.bf16.mxu0 %v328
    %392 = vmatpush1.bf16.msra.mxu0 %v327
    %393 = vmatprep.subr.bf16.mxu0 %v330
    %394 = vmatpush1.bf16.msra.mxu0 %v329
    %395 = vmatprep.subr.bf16.mxu0 %v332
    %396 = vmatpush1.bf16.msra.mxu0 %v331
    %397 = vmatprep.subr.bf16.mxu0 %v334
    %398 = vmatpush1.bf16.msra.mxu0 %v333
    %399 = vmatprep.subr.bf16.mxu0 %v336
    %400 = vmatpush1.bf16.msra.mxu0 %v335
    %401 = vmatprep.subr.bf16.mxu0 %v338
    %402 = vmatpush1.bf16.msra.mxu0 %v337
    %403 = vmatprep.subr.bf16.mxu0 %v340
    %404 = vmatpush1.bf16.msra.mxu0 %v339
    %405 = vmatprep.subr.bf16.mxu0 %v342
    %406 = vmatpush1.bf16.msra.mxu0 %v341
    %407 = vmatprep.subr.bf16.mxu0 %v344
    %408 = vmatpush1.bf16.msra.mxu0 %v343
    %409 = vmatprep.subr.bf16.mxu0 %v346
    %410 = vmatpush1.bf16.msra.mxu0 %v345
    %411 = vmatprep.subr.bf16.mxu0 %v348
    %412 = vmatpush1.bf16.msra.mxu0 %v347
    %413 = vmatprep.subr.bf16.mxu0 %v350
    %414 = vmatpush1.bf16.msra.mxu0 %v349
    %415 = vmatprep.subr.bf16.mxu0 %v352
    %416 = vmatpush1.bf16.msra.mxu0 %v351
    %417 = vmatprep.subr.bf16.mxu0 %v354
    %418 = vmatpush1.bf16.msra.mxu0 %v353
    %419 = vmatprep.mubr.bf16.mxu0 %v182
    %420 = vmatmul.mubr.bf16.gmra.mrb[0].mxu0 %v181
    %v421 = vpop.f32.mrb[0].mxu0
    %v422 = vadd.f32 %v220, %v421
    %v423 = vpop.f32.mrb[0].mxu0
    %v424 = vadd.f32 %v224, %v423
    %v425 = vpop.f32.mrb[0].mxu0
    %v426 = vpop.f32.mrb[0].mxu0
    %427 = vdwg.mxu0
    %428 = vst [vmem:[#allocation8] sm:$0xff] %v422
    %429 = vst [vmem:[#allocation8 + $0x8] sm:$0xff] %v424
    // Predicated region
    $region34: #{tpu_custom_call.1} parent=1 // pred_check
      _
    $region35: #{tpu_custom_call.1} parent=1 // pred_check_branch
      %431 = sbr.rel (0) target = $region37
    $region36: #{tpu_custom_call.1} parent=1 // pred_region
      %s433 = ssub.s32 256, 256
      %434 = vsyncadd [#allocation4], %s433
      %s436 = sshll.u32 [#allocation8], 4
      %s437 = int_to_ptr.vmem [resolvable:$true] %s436
      %439 = dma.vmem_to_hbm [thread:$0]  %s437, 256, %s5, [#allocation4]
    $region37: #{tpu_custom_call.1} parent=1 // pred_fallthru
      _
    // Predicated region
    $region38: #{tpu_custom_call.1} parent=1 // pred_check
      _
    $region39: #{tpu_custom_call.1} parent=1 // pred_check_branch
      %441 = sbr.rel (0) target = $region41
    $region40: #{tpu_custom_call.1} parent=1 // pred_region
      %442 = dma.done [#allocation4], 256
    $region41: #{tpu_custom_call.1} parent=1 // pred_fallthru
      _
    %443 = vsyncpa [#allocation3], 1
    %444 = vsyncpa [#allocation6], 1
    %445 = vsyncpa [#allocation4], 1

// kernel: tpu_custom_call.1
$region0: #{tpu_custom_call.1}
  #allocation0 [shape = 'u32[]', space=smem, size = 0x4, offset = 0x4, fixed_abs, tag = 'smem constant byte address 0x4 - core index']
  #allocation1 [shape = 'u32[144,128]{1,0:T(1,128)}', space=vmem, size = 0x12000, scoped, tag = 'internal scratch']
  %s0 = inlined_call_operand.hbm [shape: bf16[8,64], index: 0, kind: input, shape index: {}]
  %s1 = inlined_call_operand.hbm [shape: bf16[64,256], index: 1, kind: input, shape index: {}]
  %s2 = inlined_call_operand.vmem [shape: f32[1,256], index: 2, kind: input, shape index: {}]
  %s3 = inlined_call_operand.hbm [shape: bf16[256,256], index: 3, kind: input, shape index: {}]
  %s4 = inlined_call_operand.vmem [shape: f32[1,256], index: 4, kind: input, shape index: {}]
  %s5 = inlined_call_operand.hbm [shape: f32[8,256], index: 5, kind: output, shape index: {}]
  %s6 = sld [smem:[#allocation0]]
  $region42: #{tpu_custom_call.1} parent=0
    _
  %s8 = ssub.s32 1, %s6
  %s9 = scalar_select 0, %s8, %s6
  $region1: #{tpu_custom_call.1} parent=0
    #allocation2 [shape = 'u8[2048]{0}', space=vmem, size = 0x800, scoped, tag = 'input window, operand 0, single buffered']
    #allocation3 [shape = 's32[1]{0}', space=sflag, size = 0x4, scoped, tag = 'scoped memory for tpu_custom_call.1']
    #allocation4 [shape = 's32[1]{0}', space=sflag, size = 0x4, scoped, tag = 'scoped memory for tpu_custom_call.1']
    #allocation5 [shape = 'u8[32768]{0}', space=vmem, size = 0x8000, scoped, tag = 'input window, operand 1, single buffered']
    #allocation6 [shape = 's32[1]{0}', space=sflag, size = 0x4, scoped, tag = 'scoped memory for tpu_custom_call.1']
    #allocation7 [shape = 'u8[131072]{0}', space=vmem, size = 0x20000, scoped, tag = 'input window, operand 3, single buffered']
    #allocation8 [shape = 'u8[8192]{0}', space=vmem, size = 0x2000, scoped, tag = 'output window, operand 0, single buffered']
    %10 = vsyncpa [#allocation3], 0
    %11 = vsyncpa [#allocation6], 0
    %12 = vsyncpa [#allocation4], 0
    // Predicated region
    $region2: #{tpu_custom_call.1} parent=1 // pred_check
      _
    $region3: #{tpu_custom_call.1} parent=1 // pred_check_branch
      %14 = sbr.rel (0) target = $region5
    $region4: #{tpu_custom_call.1} parent=1 // pred_region
      %s16 = ssub.s32 64, 64
      %17 = vsyncadd [#allocation3], %s16
      %s19 = sshll.u32 [#allocation2], 4
      %s20 = int_to_ptr.vmem [resolvable:$true] %s19
      %22 = dma.hbm_to_vmem [thread:$0]  %s0, 64, %s20, [#allocation3]
    $region5: #{tpu_custom_call.1} parent=1 // pred_fallthru
      _
    // Predicated region
    $region6: #{tpu_custom_call.1} parent=1 // pred_check
      _
    $region7: #{tpu_custom_call.1} parent=1 // pred_check_branch
      %24 = sbr.rel (0) target = $region9
    $region8: #{tpu_custom_call.1} parent=1 // pred_region
      %s26 = ssub.s32 1024, 1024
      %27 = vsyncadd [#allocation6], %s26
      %s28 = sshll.u32 [#allocation5], 4
      %s29 = int_to_ptr.vmem [resolvable:$true] %s28
      %34 = dma.hbm_to_vmem [thread:$0]  %s1, 1024, %s29, [#allocation6], 128, 128, 8
    $region9: #{tpu_custom_call.1} parent=1 // pred_fallthru
      _
    // Predicated region
    $region10: #{tpu_custom_call.1} parent=1 // pred_check
      _
    $region11: #{tpu_custom_call.1} parent=1 // pred_check_branch
      %36 = sbr.rel (0) target = $region13
    $region12: #{tpu_custom_call.1} parent=1 // pred_region
      _
    $region13: #{tpu_custom_call.1} parent=1 // pred_fallthru
      _
    // Predicated region
    $region14: #{tpu_custom_call.1} parent=1 // pred_check
      _
    $region15: #{tpu_custom_call.1} parent=1 // pred_check_branch
      %38 = sbr.rel (0) target = $region17
    $region16: #{tpu_custom_call.1} parent=1 // pred_region
      %s40 = ssub.s32 4096, 4096
      %41 = vsyncadd [#allocation6], %s40
      %s42 = sshll.u32 [#allocation7], 4
      %s43 = int_to_ptr.vmem [resolvable:$true] %s42
      %48 = dma.hbm_to_vmem [thread:$0]  %s3, 4096, %s43, [#allocation6], 128, 128, 8
    $region17: #{tpu_custom_call.1} parent=1 // pred_fallthru
      _
    // Predicated region
    $region18: #{tpu_custom_call.1} parent=1 // pred_check
      _
    $region19: #{tpu_custom_call.1} parent=1 // pred_check_branch
      %50 = sbr.rel (0) target = $region21
    $region20: #{tpu_custom_call.1} parent=1 // pred_region
      _
    $region21: #{tpu_custom_call.1} parent=1 // pred_fallthru
      _
    // Predicated region
    $region22: #{tpu_custom_call.1} parent=1 // pred_check
      _
    $region23: #{tpu_custom_call.1} parent=1 // pred_check_branch
      %52 = sbr.rel (0) target = $region25
    $region24: #{tpu_custom_call.1} parent=1 // pred_region
      %53 = dma.done [#allocation3], 64
    $region25: #{tpu_custom_call.1} parent=1 // pred_fallthru
      _
    // Predicated region
    $region26: #{tpu_custom_call.1} parent=1 // pred_check
      _
    $region27: #{tpu_custom_call.1} parent=1 // pred_check_branch
      %55 = sbr.rel (0) target = $region29
    $region28: #{tpu_custom_call.1} parent=1 // pred_region
      %56 = dma.done [#allocation6], 1024
    $region29: #{tpu_custom_call.1} parent=1 // pred_fallthru
      _
    // Predicated region
    $region30: #{tpu_custom_call.1} parent=1 // pred_check
      _
    $region31: #{tpu_custom_call.1} parent=1 // pred_check_branch
      %58 = sbr.rel (0) target = $region33
    $region32: #{tpu_custom_call.1} parent=1 // pred_region
      %59 = dma.done [#allocation6], 4096
    $region33: #{tpu_custom_call.1} parent=1 // pred_fallthru
      _
    %v61 = vld [vmem:[#allocation2] sm:$0xf]
    %v62 = vld [vmem:[#allocation5] sm:$0xff]
    %v63 = vld [vmem:[#allocation5 + $0x8] sm:$0xff]
    %v64 = vld [vmem:[#allocation5 + $0x10] sm:$0xff]
    %v65 = vld [vmem:[#allocation5 + $0x18] sm:$0xff]
    %v66 = vld [vmem:[#allocation5 + $0x20] sm:$0xff]
    %v67 = vld [vmem:[#allocation5 + $0x28] sm:$0xff]
    %v68 = vld [vmem:[#allocation5 + $0x30] sm:$0xff]
    %v69 = vld [vmem:[#allocation5 + $0x38] sm:$0xff]
    %v70 = vld [vmem:[%s2] sm:$0x3]
    %v72 = vlaneseq
    %v73 = vshrl.u32 %v72, 7
    %v74 = vsub.s32 0, %v73
    %v75 = vrot.slane %v70, %v74
    %v76 = vlaneseq
    %v77 = vshrl.u32 %v76, 7
    %v78 = vsub.s32 1, %v77
    %v79 = vrot.slane %v70, %v78
    %v90 = vunpack.c.l.b16 %v62
    %v91 = vunpack.c.h.b16 %v62
    %v92 = vunpack.c.l.b16 %v63
    %v93 = vunpack.c.h.b16 %v63
    %v94 = vunpack.c.l.b16 %v64
    %v95 = vunpack.c.h.b16 %v64
    %v96 = vunpack.c.l.b16 %v65
    %v97 = vunpack.c.h.b16 %v65
    %v98 = vunpack.c.l.b16 %v66
    %v99 = vunpack.c.h.b16 %v66
    %v100 = vunpack.c.l.b16 %v67
    %v101 = vunpack.c.h.b16 %v67
    %v102 = vunpack.c.l.b16 %v68
    %v103 = vunpack.c.h.b16 %v68
    %v104 = vunpack.c.l.b16 %v69
    %v105 = vunpack.c.h.b16 %v69
    %v106 = vpack.c.b16 %v92, %v90
    %v107 = vpack.c.b16 %v93, %v91
    %v108 = vpack.c.b16 %v96, %v94
    %v109 = vpack.c.b16 %v97, %v95
    %v110 = vpack.c.b16 %v100, %v98
    %v111 = vpack.c.b16 %v101, %v99
    %v112 = vpack.c.b16 %v104, %v102
    %v113 = vpack.c.b16 %v105, %v103
    %vm122 = vcmask 523264
    %v124 = vsel %vm122, %v61, 0
    %126 = vmatprep.subr.bf16.mxu0 %v107
    %127 = vmatpush1.bf16.msra.mxu0 %v106
    %128 = vmatprep.subr.bf16.mxu0 %v109
    %129 = vmatpush1.bf16.msra.mxu0 %v108
    %130 = vmatprep.subr.bf16.mxu0 %v111
    %131 = vmatpush1.bf16.msra.mxu0 %v110
    %132 = vmatprep.subr.bf16.mxu0 %v113
    %133 = vmatpush1.bf16.msra.mxu0 %v112
    %134 = vmatprep.subr.bf16.mxu0 0
    %135 = vmatpush1.bf16.msra.mxu0 0
    %136 = vmatprep.subr.bf16.mxu0 0
    %137 = vmatpush1.bf16.msra.mxu0 0
    %138 = vmatprep.subr.bf16.mxu0 0
    %139 = vmatpush1.bf16.msra.mxu0 0
    %140 = vmatprep.subr.bf16.mxu0 0
    %141 = vmatpush1.bf16.msra.mxu0 0
    %142 = vmatprep.subr.bf16.mxu0 0
    %143 = vmatpush1.bf16.msra.mxu0 0
    %144 = vmatprep.subr.bf16.mxu0 0
    %145 = vmatpush1.bf16.msra.mxu0 0
    %146 = vmatprep.subr.bf16.mxu0 0
    %147 = vmatpush1.bf16.msra.mxu0 0
    %148 = vmatprep.subr.bf16.mxu0 0
    %149 = vmatpush1.bf16.msra.mxu0 0
    %150 = vmatprep.subr.bf16.mxu0 0
    %151 = vmatpush1.bf16.msra.mxu0 0
    %152 = vmatprep.subr.bf16.mxu0 0
    %153 = vmatpush1.bf16.msra.mxu0 0
    %154 = vmatprep.subr.bf16.mxu0 0
    %155 = vmatpush1.bf16.msra.mxu0 0
    %156 = vmatprep.subr.bf16.mxu0 0
    %157 = vmatpush1.bf16.msra.mxu0 0
    %158 = vmatprep.mubr.bf16.mxu0 0
    %159 = vmatmul.mubr.bf16.gmra.mrb[0].mxu0 %v124
    %v160 = vpop.f32.mrb[0].mxu0
    %v161 = vadd.f32 %v75, %v160
    %v162 = vpop.f32.mrb[0].mxu0
    %v163 = vadd.f32 %v79, %v162
    %v164 = vpop.f32.mrb[0].mxu0
    %v165 = vpop.f32.mrb[0].mxu0
    %166 = vdwg.mxu0
    %v167 = vxor.u32 %v161, 2147483648
    %v168 = vxor.u32 %v163, 2147483648
    %v169 = vmul.f32 %v167, 1.442695
    %v170 = vpow.pop %v169
    %v171 = vmul.f32 %v168, 1.442695
    %v172 = vpow.pop %v171
    %v173 = vadd.f32 %v170, 1.0
    %v174 = vadd.f32 %v172, 1.0
    %v175 = vrcp.pop %v173
    %v176 = vmul.f32 1.0, %v175
    %v177 = vrcp.pop %v174
    %v178 = vmul.f32 1.0, %v177
    %v179 = vmul.f32 %v161, %v176
    %v180 = vmul.f32 %v163, %v178
    %v181 = vpack.c.bf16 %v179, %v179
    %v182 = vpack.c.bf16 %v180, %v180
    %v183 = vld [vmem:[#allocation7] sm:$0xff]
    %v184 = vld [vmem:[#allocation7 + $0x8] sm:$0xff]
    %v185 = vld [vmem:[#allocation7 + $0x10] sm:$0xff]
    %v186 = vld [vmem:[#allocation7 + $0x18] sm:$0xff]
    %v187 = vld [vmem:[#allocation7 + $0x20] sm:$0xff]
    %v188 = vld [vmem:[#allocation7 + $0x28] sm:$0xff]
    %v189 = vld [vmem:[#allocation7 + $0x30] sm:$0xff]
    %v190 = vld [vmem:[#allocation7 + $0x38] sm:$0xff]
    %v191 = vld [vmem:[#allocation7 + $0x40] sm:$0xff]
    %v192 = vld [vmem:[#allocation7 + $0x48] sm:$0xff]
    %v193 = vld [vmem:[#allocation7 + $0x50] sm:$0xff]
    %v194 = vld [vmem:[#allocation7 + $0x58] sm:$0xff]
    %v195 = vld [vmem:[#allocation7 + $0x60] sm:$0xff]
    %v196 = vld [vmem:[#allocation7 + $0x68] sm:$0xff]
    %v197 = vld [vmem:[#allocation7 + $0x70] sm:$0xff]
    %v198 = vld [vmem:[#allocation7 + $0x78] sm:$0xff]
    %v199 = vld [vmem:[#allocation7 + $0x80] sm:$0xff]
    %v200 = vld [vmem:[#allocation7 + $0x88] sm:$0xff]
    %v201 = vld [vmem:[#allocation7 + $0x90] sm:$0xff]
    %v202 = vld [vmem:[#allocation7 + $0x98] sm:$0xff]
    %v203 = vld [vmem:[#allocation7 + $0xa0] sm:$0xff]
    %v204 = vld [vmem:[#allocation7 + $0xa8] sm:$0xff]
    %v205 = vld [vmem:[#allocation7 + $0xb0] sm:$0xff]
    %v206 = vld [vmem:[#allocation7 + $0xb8] sm:$0xff]
    %v207 = vld [vmem:[#allocation7 + $0xc0] sm:$0xff]
    %v208 = vld [vmem:[#allocation7 + $0xc8] sm:$0xff]
    %v209 = vld [vmem:[#allocation7 + $0xd0] sm:$0xff]
    %v210 = vld [vmem:[#allocation7 + $0xd8] sm:$0xff]
    %v211 = vld [vmem:[#allocation7 + $0xe0] sm:$0xff]
    %v212 = vld [vmem:[#allocation7 + $0xe8] sm:$0xff]
    %v213 = vld [vmem:[#allocation7 + $0xf0] sm:$0xff]
    %v214 = vld [vmem:[#allocation7 + $0xf8] sm:$0xff]
    %v215 = vld [vmem:[%s4] sm:$0x3]
    %v217 = vlaneseq
    %v218 = vshrl.u32 %v217, 7
    %v219 = vsub.s32 0, %v218
    %v220 = vrot.slane %v215, %v219
    %v221 = vlaneseq
    %v222 = vshrl.u32 %v221, 7
    %v223 = vsub.s32 1, %v222
    %v224 = vrot.slane %v215, %v223
    %v259 = vunpack.c.l.b16 %v183
    %v260 = vunpack.c.h.b16 %v183
    %v261 = vunpack.c.l.b16 %v184
    %v262 = vunpack.c.h.b16 %v184
    %v263 = vunpack.c.l.b16 %v185
    %v264 = vunpack.c.h.b16 %v185
    %v265 = vunpack.c.l.b16 %v186
    %v266 = vunpack.c.h.b16 %v186
    %v267 = vunpack.c.l.b16 %v187
    %v268 = vunpack.c.h.b16 %v187
    %v269 = vunpack.c.l.b16 %v188
    %v270 = vunpack.c.h.b16 %v188
    %v271 = vunpack.c.l.b16 %v189
    %v272 = vunpack.c.h.b16 %v189
    %v273 = vunpack.c.l.b16 %v190
    %v274 = vunpack.c.h.b16 %v190
    %v275 = vunpack.c.l.b16 %v191
    %v276 = vunpack.c.h.b16 %v191
    %v277 = vunpack.c.l.b16 %v192
    %v278 = vunpack.c.h.b16 %v192
    %v279 = vunpack.c.l.b16 %v193
    %v280 = vunpack.c.h.b16 %v193
    %v281 = vunpack.c.l.b16 %v194
    %v282 = vunpack.c.h.b16 %v194
    %v283 = vunpack.c.l.b16 %v195
    %v284 = vunpack.c.h.b16 %v195
    %v285 = vunpack.c.l.b16 %v196
    %v286 = vunpack.c.h.b16 %v196
    %v287 = vunpack.c.l.b16 %v197
    %v288 = vunpack.c.h.b16 %v197
    %v289 = vunpack.c.l.b16 %v198
    %v290 = vunpack.c.h.b16 %v198
    %v291 = vunpack.c.l.b16 %v199
    %v292 = vunpack.c.h.b16 %v199
    %v293 = vunpack.c.l.b16 %v200
    %v294 = vunpack.c.h.b16 %v200
    %v295 = vunpack.c.l.b16 %v201
    %v296 = vunpack.c.h.b16 %v201
    %v297 = vunpack.c.l.b16 %v202
    %v298 = vunpack.c.h.b16 %v202
    %v299 = vunpack.c.l.b16 %v203
    %v300 = vunpack.c.h.b16 %v203
    %v301 = vunpack.c.l.b16 %v204
    %v302 = vunpack.c.h.b16 %v204
    %v303 = vunpack.c.l.b16 %v205
    %v304 = vunpack.c.h.b16 %v205
    %v305 = vunpack.c.l.b16 %v206
    %v306 = vunpack.c.h.b16 %v206
    %v307 = vunpack.c.l.b16 %v207
    %v308 = vunpack.c.h.b16 %v207
    %v309 = vunpack.c.l.b16 %v208
    %v310 = vunpack.c.h.b16 %v208
    %v311 = vunpack.c.l.b16 %v209
    %v312 = vunpack.c.h.b16 %v209
    %v313 = vunpack.c.l.b16 %v210
    %v314 = vunpack.c.h.b16 %v210
    %v315 = vunpack.c.l.b16 %v211
    %v316 = vunpack.c.h.b16 %v211
    %v317 = vunpack.c.l.b16 %v212
    %v318 = vunpack.c.h.b16 %v212
    %v319 = vunpack.c.l.b16 %v213
    %v320 = vunpack.c.h.b16 %v213
    %v321 = vunpack.c.l.b16 %v214
    %v322 = vunpack.c.h.b16 %v214
    %v323 = vpack.c.b16 %v261, %v259
    %v324 = vpack.c.b16 %v262, %v260
    %v325 = vpack.c.b16 %v265, %v263
    %v326 = vpack.c.b16 %v266, %v264
    %v327 = vpack.c.b16 %v269, %v267
    %v328 = vpack.c.b16 %v270, %v268
    %v329 = vpack.c.b16 %v273, %v271
    %v330 = vpack.c.b16 %v274, %v272
    %v331 = vpack.c.b16 %v277, %v275
    %v332 = vpack.c.b16 %v278, %v276
    %v333 = vpack.c.b16 %v281, %v279
    %v334 = vpack.c.b16 %v282, %v280
    %v335 = vpack.c.b16 %v285, %v283
    %v336 = vpack.c.b16 %v286, %v284
    %v337 = vpack.c.b16 %v289, %v287
    %v338 = vpack.c.b16 %v290, %v288
    %v339 = vpack.c.b16 %v293, %v291
    %v340 = vpack.c.b16 %v294, %v292
    %v341 = vpack.c.b16 %v297, %v295
    %v342 = vpack.c.b16 %v298, %v296
    %v343 = vpack.c.b16 %v301, %v299
    %v344 = vpack.c.b16 %v302, %v300
    %v345 = vpack.c.b16 %v305, %v303
    %v346 = vpack.c.b16 %v306, %v304
    %v347 = vpack.c.b16 %v309, %v307
    %v348 = vpack.c.b16 %v310, %v308
    %v349 = vpack.c.b16 %v313, %v311
    %v350 = vpack.c.b16 %v314, %v312
    %v351 = vpack.c.b16 %v317, %v315
    %v352 = vpack.c.b16 %v318, %v316
    %v353 = vpack.c.b16 %v321, %v319
    %v354 = vpack.c.b16 %v322, %v320
    %387 = vmatprep.subr.bf16.mxu0 %v324
    %388 = vmatpush1.bf16.msra.mxu0 %v323
    %389 = vmatprep.subr.bf16.mxu0 %v326
    %390 = vmatpush1.bf16.msra.mxu0 %v325
    %391 = vmatprep.subr.bf16.mxu0 %v328
    %392 = vmatpush1.bf16.msra.mxu0 %v327
    %393 = vmatprep.subr.bf16.mxu0 %v330
    %394 = vmatpush1.bf16.msra.mxu0 %v329
    %395 = vmatprep.subr.bf16.mxu0 %v332
    %396 = vmatpush1.bf16.msra.mxu0 %v331
    %397 = vmatprep.subr.bf16.mxu0 %v334
    %398 = vmatpush1.bf16.msra.mxu0 %v333
    %399 = vmatprep.subr.bf16.mxu0 %v336
    %400 = vmatpush1.bf16.msra.mxu0 %v335
    %401 = vmatprep.subr.bf16.mxu0 %v338
    %402 = vmatpush1.bf16.msra.mxu0 %v337
    %403 = vmatprep.subr.bf16.mxu0 %v340
    %404 = vmatpush1.bf16.msra.mxu0 %v339
    %405 = vmatprep.subr.bf16.mxu0 %v342
    %406 = vmatpush1.bf16.msra.mxu0 %v341
    %407 = vmatprep.subr.bf16.mxu0 %v344
    %408 = vmatpush1.bf16.msra.mxu0 %v343
    %409 = vmatprep.subr.bf16.mxu0 %v346
    %410 = vmatpush1.bf16.msra.mxu0 %v345
    %411 = vmatprep.subr.bf16.mxu0 %v348
    %412 = vmatpush1.bf16.msra.mxu0 %v347
    %413 = vmatprep.subr.bf16.mxu0 %v350
    %414 = vmatpush1.bf16.msra.mxu0 %v349
    %415 = vmatprep.subr.bf16.mxu0 %v352
    %416 = vmatpush1.bf16.msra.mxu0 %v351
    %417 = vmatprep.subr.bf16.mxu0 %v354
    %418 = vmatpush1.bf16.msra.mxu0 %v353
    %419 = vmatprep.mubr.bf16.mxu0 %v182
    %420 = vmatmul.mubr.bf16.gmra.mrb[0].mxu0 %v181
    %v421 = vpop.f32.mrb[0].mxu0
    %v422 = vadd.f32 %v220, %v421
    %v423 = vpop.f32.mrb[0].mxu0
    %v424 = vadd.f32 %v224, %v423
    %v425 = vpop.f32.mrb[0].mxu0
    %v426 = vpop.f32.mrb[0].mxu0
    %427 = vdwg.mxu0
    %428 = vst [vmem:[#allocation8] sm:$0xff] %v422
    %429 = vst [vmem:[#allocation8 + $0x8] sm:$0xff] %v424
    // Predicated region
    $region34: #{tpu_custom_call.1} parent=1 // pred_check
      _
    $region35: #{tpu_custom_call.1} parent=1 // pred_check_branch
      %431 = sbr.rel (0) target = $region37
    $region36: #{tpu_custom_call.1} parent=1 // pred_region
      %s433 = ssub.s32 256, 256
      %434 = vsyncadd [#allocation4], %s433
      %s436 = sshll.u32 [#allocation8], 4
      %s437 = int_to_ptr.vmem [resolvable:$true] %s436
      %439 = dma.vmem_to_hbm [thread:$0]  %s437, 256, %s5, [#allocation4]
    $region37: #{tpu_custom_call.1} parent=1 // pred_fallthru
      _
    // Predicated region
    $region38: #{tpu_custom_call.1} parent=1 // pred_check
      _
    $region39: #{tpu_custom_call.1} parent=1 // pred_check_branch
      %441 = sbr.rel (0) target = $region41
    $region40: #{tpu_custom_call.1} parent=1 // pred_region
      %442 = dma.done [#allocation4], 256
    $region41: #{tpu_custom_call.1} parent=1 // pred_fallthru
      _
    %443 = vsyncpa [#allocation3], 1
    %444 = vsyncpa [#allocation6], 1
    %445 = vsyncpa [#allocation4], 1

</llo_original>
